<compile_context>
chip_gen: v7x
topology: tpu7x:2x2x1
jax: 0.10.0
libtpu: 0.0.40
codegen_flags: <defaults>
</compile_context>

<pallas_src>
import jax
import jax.numpy as jnp
from jax.experimental import pallas as pl
from jax.experimental.pallas import tpu as pltpu


LANES = 128
ROW_ALIGN = 32                      # safe sublane alignment for f32/bf16/fp8
MAX_TILE_ROWS = 1024                # (1024, 128) f32 block = 512 KiB per buffer
SINGLE_BLOCK_MAX_ROWS = 2 * MAX_TILE_ROWS   # up to ~1 MiB handled as one block


def _round_up(x, m):
    return -(-x // m) * m


# --------------------------------------------------------------------------
# Pallas kernel: streaming any-isnan reduction.
#   grid = (slots, steps); axis 0 "parallel" (megacore on v7x), axis 1
#   "arbitrary" (reduction).  Per step: elementwise isnan over the big tile,
#   inter-vreg max fold to (1,128), broadcast-max into the resident (8,128)
#   accumulator block for this slot.  No per-step narrow stores, no per-step
#   HBM writeback of the accumulator.
# --------------------------------------------------------------------------
def _has_nan_kernel(x_ref, acc_ref):
    @pl.when(pl.program_id(1) == 0)
    def _():
        acc_ref[...] = jnp.zeros_like(acc_ref)

    nan_mask = jnp.isnan(x_ref[...]).astype(jnp.float32)           # (tile_rows, 128)
    nan_lanes = jnp.max(nan_mask, axis=0, keepdims=True)           # (1, 128)
    acc_ref[...] = jnp.maximum(acc_ref[...], nan_lanes)            # broadcast into (8, 128)


def _nan_reduce_slab(slab, tile_rows, slots, steps):
    return pl.pallas_call(
        _has_nan_kernel,
        out_shape=jax.ShapeDtypeStruct((slots * 8, LANES), jnp.float32),
        grid_spec=pltpu.PrefetchScalarGridSpec(
            num_scalar_prefetch=0,
            grid=(slots, steps),
            in_specs=[
                pl.BlockSpec((tile_rows, LANES), lambda c, i: (c * steps + i, 0)),
            ],
            out_specs=pl.BlockSpec((8, LANES), lambda c, i: (c, 0)),
        ),
        compiler_params=pltpu.CompilerParams(
            dimension_semantics=("parallel", "arbitrary"),
        ),
    )(slab)


@jax.jit
def _param_has_nan(p):
    """Per-parameter NaN check in the parameter's native dtype.

    The flatten is a free bitcast; zero-padding (never NaN) is applied only up
    to the tile boundary of this single parameter — no global concat, no f32
    upcast — and everything (pad + reshape + kernel + final any) dispatches as
    one jitted computation.
    """
    if p.size == 0 or not jnp.issubdtype(p.dtype, jnp.floating):
        return jnp.zeros((), dtype=jnp.bool_)

    flat = jnp.ravel(p)
    n = flat.shape[0]
    rows = _round_up(_round_up(n, LANES) // LANES, ROW_ALIGN)

    if rows <= SINGLE_BLOCK_MAX_ROWS:
        # Small / medium parameter: one block, one grid step, one slot.
        total_rows, tile_rows, slots = rows, rows, 1
    else:
        # Large parameter: 512 KiB blocks, pipelined, split across 2 slots
        # (both TensorCores on v7x; harmless sequential halves on v5e/v6e).
        slots, tile_rows = 2, MAX_TILE_ROWS
        total_rows = _round_up(rows, slots * tile_rows)
    steps = total_rows // (slots * tile_rows)

    padded_n = total_rows * LANES
    if padded_n != n:
        flat = jnp.pad(flat, (0, padded_n - n))    # zero pad — never NaN
    slab = flat.reshape(total_rows, LANES)

    acc = _nan_reduce_slab(slab, tile_rows, slots, steps)
    return jnp.any(acc > 0.0)


class BaseNetworkJAX:
    """JAX/Pallas port of torch_utils.base_network.BaseNetwork.

    forward() is abstract in the original module; has_nan() is implemented as
    per-parameter Pallas TPU streaming reductions (native dtype, large tiles).
    """

    def __init__(self, network_name, params):
        self.network_name = network_name
        self._params = list(params)

    def parameters(self):
        return self._params

    def forward(self, inputs):
        # Abstract in the PyTorch module.
        raise NotImplementedError

    def has_nan(self):
        flags = [_param_has_nan(p) for p in self._params]
        if not flags:
            return jnp.zeros((), dtype=jnp.bool_)
        return jnp.any(jnp.stack(flags))


if __name__ == "__main__":
    key = jax.random.PRNGKey(0)
    kw, kb, kv = jax.random.split(key, 3)

    # Deterministic synthetic parameters (a small linear layer plus one larger
    # weight that exercises the multi-step / two-slot / padded tiling path).
    weight = jax.random.normal(kw, (32, 32), dtype=jnp.float32)
    bias = jax.random.normal(kb, (32,), dtype=jnp.float32)
    big_weight = jax.random.normal(kv, (520, 1040), dtype=jnp.float32)

    net = BaseNetworkJAX("base_network", [weight, bias, big_weight])
    result_clean = jax.block_until_ready(net.has_nan())
    assert bool(result_clean) is False, "clean params reported NaN"

    # NaN in the small parameter.
    weight_nan = weight.at[3, 7].set(jnp.nan)
    net_nan_small = BaseNetworkJAX("base_network", [weight_nan, bias, big_weight])
    result_small = jax.block_until_ready(net_nan_small.has_nan())
    assert bool(result_small) is True, "NaN in small param not detected"

    # NaN in the last element of the large parameter (last real tile, before padding).
    big_nan = big_weight.at[519, 1039].set(jnp.nan)
    net_nan_big = BaseNetworkJAX("base_network", [weight, bias, big_nan])
    result_big = jax.block_until_ready(net_nan_big.has_nan())
    assert bool(result_big) is True, "NaN in large param not detected"

    print("KERNEL_OK")
</pallas_src>

<mosaic_0001>
module attributes {stable_mosaic.version = 11 : i64} {
  func.func @_has_nan_kernel(%arg0: i32, %arg1: i32, %arg2: memref<32x128xf32, #tpu.memory_space<vmem>>, %arg3: memref<8x128xf32, #tpu.memory_space<vmem>>) attributes {dimension_semantics = [#tpu.dimension_semantics<parallel>, #tpu.dimension_semantics<arbitrary>], iteration_bounds = array<i64: 1, 1>, scalar_prefetch = 0 : i64, scratch_operands = 0 : i64, tpu.core_type = #tpu.core_type<tc>, window_params = [{transform_indices = @transform_0, window_bounds = array<i64: 32, 128>}, {transform_indices = @transform_1, window_bounds = array<i64: 8, 128>}]} {
    %c0_i32 = arith.constant 0 : i32
    %0 = arith.cmpi eq, %arg1, %c0_i32 : i32
    %1 = arith.extui %0 : i1 to i32
    %c0_i32_0 = arith.constant 0 : i32
    %2 = arith.cmpi ne, %1, %c0_i32_0 : i32
    scf.if %2 {
      %cst_6 = arith.constant 0.000000e+00 : f32
      %13 = vector.broadcast %cst_6 : f32 to vector<8x128xf32>
      %c0_7 = arith.constant 0 : index
      %c0_8 = arith.constant 0 : index
      %14 = vector.load %arg3[%c0_7, %c0_8] : memref<8x128xf32, #tpu.memory_space<vmem>>, vector<8x128xf32>
      tpu.vector_store %arg3[%c0_7, %c0_8], %13 {strides = array<i32>} : memref<8x128xf32, #tpu.memory_space<vmem>>, vector<8x128xf32>,
    } else {
    }
    %c0 = arith.constant 0 : index
    %c0_1 = arith.constant 0 : index
    %3 = vector.load %arg2[%c0, %c0_1] : memref<32x128xf32, #tpu.memory_space<vmem>>, vector<32x128xf32>
    %4 = arith.cmpf one, %3, %3 : vector<32x128xf32>
    %5 = arith.extui %4 : vector<32x128xi1> to vector<32x128xi32>
    %6 = arith.sitofp %5 : vector<32x128xi32> to vector<32x128xf32>
    %cst = arith.constant dense<0xFF800000> : vector<128xf32>
    %7 = vector.multi_reduction <maximumf>, %6, %cst [0] : vector<32x128xf32> to vector<128xf32>
    %8 = vector.shape_cast %7 : vector<128xf32> to vector<1x128xf32>
    %c0_2 = arith.constant 0 : index
    %c0_3 = arith.constant 0 : index
    %9 = vector.load %arg3[%c0_2, %c0_3] : memref<8x128xf32, #tpu.memory_space<vmem>>, vector<8x128xf32>
    %10 = vector.broadcast %8 : vector<1x128xf32> to vector<8x128xf32>
    %11 = arith.maximumf %9, %10 : vector<8x128xf32>
    %c0_4 = arith.constant 0 : index
    %c0_5 = arith.constant 0 : index
    %12 = vector.load %arg3[%c0_4, %c0_5] : memref<8x128xf32, #tpu.memory_space<vmem>>, vector<8x128xf32>
    tpu.vector_store %arg3[%c0_4, %c0_5], %11 {strides = array<i32>} : memref<8x128xf32, #tpu.memory_space<vmem>>, vector<8x128xf32>,
    return
  }
  func.func @transform_0(%arg0: i32, %arg1: i32) -> (i32, i32) {
    %c1_i32 = arith.constant 1 : i32
    %0 = arith.muli %arg0, %c1_i32 : i32
    %1 = arith.addi %0, %arg1 : i32
    %c0_i32 = arith.constant 0 : i32
    %c0_i32_0 = arith.constant 0 : i32
    return %1, %c0_i32 : i32, i32
  }
  func.func @transform_1(%arg0: i32, %arg1: i32) -> (i32, i32) {
    %c0_i32 = arith.constant 0 : i32
    %c0_i32_0 = arith.constant 0 : i32
    return %arg0, %c0_i32 : i32, i32
  }
}

</mosaic_0001>

<llo_original>
// kernel: _param_has_nan.1
$region0: #{_param_has_nan.1}
  #allocation0 [shape = 'u32[]', space=smem, size = 0x4, offset = 0x4, fixed_abs, tag = 'smem constant byte address 0x4 - core index']
  #allocation1 [shape = 'u32[144,128]{1,0:T(1,128)}', space=vmem, size = 0x12000, scoped, tag = 'internal scratch']
  %s0 = inlined_call_operand.vmem [shape: f32[32,128], index: 0, kind: input, shape index: {}]
  %s1 = inlined_call_operand.vmem [shape: f32[8,128], index: 1, kind: output, shape index: {}]
  %s2 = sld [smem:[#allocation0]]
  $region18: #{_param_has_nan.1} parent=0
    _
  %s4 = ssub.s32 1, %s2
  %s5 = scalar_select 0, %s4, %s2
  // Predicated region
  $region2: #{_param_has_nan.1} parent=0 // pred_check
    _
  $region3: #{_param_has_nan.1} parent=0 // pred_check_branch
    %7 = sbr.rel (0) target = $region5
  $region4: #{_param_has_nan.1} parent=0 // pred_region
    %s8 = sadd.s32 0, 0
    %s9 = smul.u32 4, %s8
    %p10 = scmp.lt.s32.totalorder %s9, 3
    %s11 = scalar_select %p10, %s9, 3
    %s12 = smul.addr %s11, 8
    %s13 = scalar_lea.vmem %s0, %s12
    %s14 = sadd.s32 0, 0
    %s15 = smul.u32 4, %s14
  $region5: #{_param_has_nan.1} parent=0 // pred_fallthru
    _
  %s16 = sadd.s32 0, 0
  %s17 = smul.u32 4, %s16
  %p18 = scmp.lt.s32.totalorder %s17, 3
  %s19 = scalar_select %p18, %s17, 3
  %s20 = smul.addr %s19, 8
  %s21 = scalar_lea.vmem %s0, %s20
  %s22 = sadd.s32 0, 0
  %s23 = smul.u32 4, %s22
  %p24 = scmp.lt.s32.totalorder %s23, 3
  %s25 = scalar_select %p24, %s23, 3
  %s26 = smul.addr %s25, 8
  %s27 = scalar_lea.vmem %s0, %s26
  %s28 = sadd.s32 0, 0
  %s29 = smul.u32 4, %s28
  %p30 = scmp.eq.s32.totalorder 0, 0
  // Predicated region
  $region6: #{_param_has_nan.1} parent=0 // pred_check
    %p31 = pneg %p30
  $region7: #{_param_has_nan.1} parent=0 // pred_check_branch
    %33 = sbr.rel (%p31) target = $region9
  $region8: #{_param_has_nan.1} parent=0 // pred_region
    %34 = vst [vmem:[%s1] sm:$0xff] 0.0
  $region9: #{_param_has_nan.1} parent=0 // pred_fallthru
    _
  %v35 = vld [vmem:[%s27] sm:$0xff]
  %v36 = vld [vmem:[%s27 + $0x8] sm:$0xff]
  %v37 = vld [vmem:[%s27 + $0x10] sm:$0xff]
  %v38 = vld [vmem:[%s27 + $0x18] sm:$0xff]
  %vm39 = vcmp.ne.f32.partialorder %v35, %v35
  %vm40 = vcmp.ne.f32.partialorder %v36, %v36
  %vm41 = vcmp.ne.f32.partialorder %v37, %v37
  %vm42 = vcmp.ne.f32.partialorder %v38, %v38
  %v43 = vsel %vm39, 1, 0
  %v44 = vsel %vm40, 1, 0
  %v45 = vsel %vm41, 1, 0
  %v46 = vsel %vm42, 1, 0
  %v47 = vcvt.s32.f32 %v43
  %v48 = vcvt.s32.f32 %v44
  %v49 = vcvt.s32.f32 %v45
  %v50 = vcvt.s32.f32 %v46
  %v51 = vmax.f32 %v47, %v48
  %v52 = vmax.f32 %v49, %v50
  %v53 = vmax.f32 %v51, %v52
  %v54 = vrot.slane %v53, 4
  %v55 = vmax.f32 %v53, %v54
  %v56 = vrot.slane %v55, 2
  %v57 = vmax.f32 %v55, %v56
  %v58 = vrot.slane %v57, 1
  %v59 = vmax.f32 %v57, %v58
  %v60 = vld [vmem:[%s1] sm:$0xff]
  %v61 = vmax.f32 %v60, %v59
  %62 = vst [vmem:[%s1] sm:$0xff] %v61
  // Predicated region
  $region10: #{_param_has_nan.1} parent=0 // pred_check
    _
  $region11: #{_param_has_nan.1} parent=0 // pred_check_branch
    %64 = sbr.rel (0) target = $region13
  $region12: #{_param_has_nan.1} parent=0 // pred_region
    _
  $region13: #{_param_has_nan.1} parent=0 // pred_fallthru
    _
  // Predicated region
  $region14: #{_param_has_nan.1} parent=0 // pred_check
    _
  $region15: #{_param_has_nan.1} parent=0 // pred_check_branch
    %66 = sbr.rel (0) target = $region17
  $region16: #{_param_has_nan.1} parent=0 // pred_region
    _
  $region17: #{_param_has_nan.1} parent=0 // pred_fallthru
    _

</llo_original>
